<compile_context>
chip_gen: v5e
topology: v5e:2x2
jax: 0.10.0
libtpu: 0.0.40
codegen_flags: <defaults>
</compile_context>

<pallas_src>
import jax
import jax.numpy as jnp
from jax.experimental import pallas as pl
from jax.experimental.pallas import tpu as pltpu


_LANE = 128
_SUBLANE = 8
_VMEM_LIMIT_BYTES = 48 * 1024 * 1024   # safe scoped-VMEM request on v5e/v6e/v7x
_VMEM_TILE_BUDGET = 36 * 1024 * 1024   # budget used when sizing the batch tile


def _round_up(n, m):
    return ((n + m - 1) // m) * m


def _pad2(a, rows, cols):
    r, c = a.shape
    return jnp.pad(a, ((0, rows - r), (0, cols - c)))


def _pick_batch_tile(B, Cp, C2p, Crp, weight_bytes):
    """Largest sublane-aligned batch tile whose live f32 footprint fits VMEM."""
    avail = max(_VMEM_TILE_BUDGET - weight_bytes, 4 * 1024 * 1024)
    # f32 bytes per batch row live in VMEM per tile:
    #   x/out double-buffered (2*2*Cp) + xn (Cp) + h1 (C2p) + h2 (Cp)
    #   + s (Crp) + gate (Cp)
    per_row = 4 * (4 * Cp + Cp + C2p + Cp + Crp + Cp)
    tb = int(avail // per_row)
    tb = max(_SUBLANE, min(tb, 1024))
    tb = (tb // _SUBLANE) * _SUBLANE
    tb = min(tb, _round_up(B, _SUBLANE))
    return max(tb, _SUBLANE)


def resblock_kernel(x_ref, scale_ref, shift_ref,
                    w1_ref, b1_ref, w2_ref, b2_ref,
                    wa_ref, ba_ref, wb_ref, bb_ref,
                    o_ref):
    x = x_ref[...]                                      # (TB, Cp) f32

    # ---- BatchNorm1d (stats hoisted; folded into scale/shift) ----
    xn = x * scale_ref[...] + shift_ref[...]

    # ---- hidden1: Linear(C -> 2C) + ReLU (bf16 operands, f32 accumulate) ----
    h1 = jnp.dot(xn.astype(jnp.bfloat16), w1_ref[...],
                 preferred_element_type=jnp.float32) + b1_ref[...]
    h1 = jnp.maximum(h1, 0.0)

    # ---- hidden2: Linear(2C -> C) ----
    h2 = jnp.dot(h1.astype(jnp.bfloat16), w2_ref[...],
                 preferred_element_type=jnp.float32) + b2_ref[...]

    # ---- SELayer: sigmoid(ReLU(h2 @ Wa + ba) @ Wb + bb) * h2 ----
    s = jnp.dot(h2.astype(jnp.bfloat16), wa_ref[...],
                preferred_element_type=jnp.float32) + ba_ref[...]
    s = jnp.maximum(s, 0.0)
    logits = jnp.dot(s.astype(jnp.bfloat16), wb_ref[...],
                     preferred_element_type=jnp.float32) + bb_ref[...]
    gate = jax.nn.sigmoid(logits)

    # ---- residual add against the ORIGINAL (un-normalized) input tile ----
    o_ref[...] = (h2 * gate + x).astype(o_ref.dtype)


def resblock_forward(x, params, *, eps=1e-5):
    """x: (B, C). params: dict of weights with linears pre-transposed to (in, out)."""
    B, C = x.shape
    C2 = params["w1"].shape[1]
    Cr = params["wa"].shape[1]

    # ---- hoisted BatchNorm1d full-batch statistics (biased variance) ----
    xf = x.astype(jnp.float32)
    mean = jnp.mean(xf, axis=0, keepdims=True)
    var = jnp.mean(jnp.square(xf - mean), axis=0, keepdims=True)
    inv = jax.lax.rsqrt(var + eps)
    scale = params["gamma"].astype(jnp.float32) * inv          # (1, C)
    shift = params["beta"].astype(jnp.float32) - mean * scale  # (1, C)

    # ---- lane-dense padding of channel dims (zeros are exact pass-throughs) ----
    Cp = _round_up(C, _LANE)
    C2p = _round_up(C2, _LANE)
    Crp = _round_up(Cr, _LANE)

    # Resident weights: pad once, cast to bf16 once (hoisted out of the grid body).
    w1 = _pad2(params["w1"], Cp, C2p).astype(jnp.bfloat16)
    w2 = _pad2(params["w2"], C2p, Cp).astype(jnp.bfloat16)
    wa = _pad2(params["wa"], Cp, Crp).astype(jnp.bfloat16)
    wb = _pad2(params["wb"], Crp, Cp).astype(jnp.bfloat16)
    b1 = _pad2(params["b1"].astype(jnp.float32), 1, C2p)
    b2 = _pad2(params["b2"].astype(jnp.float32), 1, Cp)
    ba = _pad2(params["ba"].astype(jnp.float32), 1, Crp)
    bb = _pad2(params["bb"].astype(jnp.float32), 1, Cp)
    scale_p = _pad2(scale, 1, Cp)
    shift_p = _pad2(shift, 1, Cp)

    weight_bytes = 2 * (Cp * C2p + C2p * Cp + Cp * Crp + Crp * Cp) \
        + 4 * (C2p + 3 * Cp + Crp) + 8 * Cp

    # ---- batch tiling ----
    TB = _pick_batch_tile(B, Cp, C2p, Crp, weight_bytes)
    Bp = _round_up(B, TB)
    xp = _pad2(xf, Bp, Cp)

    x_spec = pl.BlockSpec((TB, Cp), lambda i: (i, 0))

    def resident(shape):
        return pl.BlockSpec(shape, lambda i: (0, 0))

    in_specs = [
        x_spec,
        resident((1, Cp)), resident((1, Cp)),        # scale, shift
        resident((Cp, C2p)), resident((1, C2p)),     # w1, b1
        resident((C2p, Cp)), resident((1, Cp)),      # w2, b2
        resident((Cp, Crp)), resident((1, Crp)),     # wa, ba
        resident((Crp, Cp)), resident((1, Cp)),      # wb, bb
    ]

    out = pl.pallas_call(
        resblock_kernel,
        out_shape=jax.ShapeDtypeStruct((Bp, Cp), jnp.float32),
        grid=(Bp // TB,),
        in_specs=in_specs,
        out_specs=x_spec,
        compiler_params=pltpu.CompilerParams(
            dimension_semantics=("parallel",),
            vmem_limit_bytes=_VMEM_LIMIT_BYTES,
        ),
    )(xp, scale_p, shift_p, w1, b1, w2, b2, wa, ba, wb, bb)

    return out[:B, :C].astype(x.dtype)


def init_params(key, in_channel, reduction=16):
    C = in_channel
    C2 = 2 * C
    Cr = C // reduction
    ks = jax.random.split(key, 8)

    def lin(kw, kb, fan_in, fan_out):
        # PyTorch nn.Linear default init: U(-1/sqrt(fan_in), 1/sqrt(fan_in))
        bound = 1.0 / jnp.sqrt(fan_in)
        w = jax.random.uniform(kw, (fan_in, fan_out), jnp.float32, -bound, bound)
        b = jax.random.uniform(kb, (1, fan_out), jnp.float32, -bound, bound)
        return w, b

    w1, b1 = lin(ks[0], ks[1], C, C2)     # hidden1
    w2, b2 = lin(ks[2], ks[3], C2, C)     # hidden2
    wa, ba = lin(ks[4], ks[5], C, Cr)     # SE fc[0]
    wb, bb = lin(ks[6], ks[7], Cr, C)     # SE fc[2]

    return {
        "gamma": jnp.ones((1, C), jnp.float32),   # BatchNorm1d weight init
        "beta": jnp.zeros((1, C), jnp.float32),   # BatchNorm1d bias init
        "w1": w1, "b1": b1,
        "w2": w2, "b2": b2,
        "wa": wa, "ba": ba,
        "wb": wb, "bb": bb,
    }


if __name__ == "__main__":
    key = jax.random.PRNGKey(0)
    k_x, k_p = jax.random.split(key)

    B, C, reduction = 8, 32, 16   # SE bottleneck = C // reduction = 2
    x = jax.random.normal(k_x, (B, C), jnp.float32)
    params = init_params(k_p, C, reduction)

    out = resblock_forward(x, params)
    jax.block_until_ready(out)
    assert out.shape == (B, C) and out.dtype == jnp.float32
    assert bool(jnp.all(jnp.isfinite(out)))
    print("KERNEL_OK")
</pallas_src>

<mosaic_0001>
module attributes {stable_mosaic.version = 11 : i64} {
  func.func @resblock_kernel(%arg0: i32, %arg1: memref<8x128xf32, #tpu.memory_space<vmem>>, %arg2: memref<1x128xf32, #tpu.memory_space<vmem>>, %arg3: memref<1x128xf32, #tpu.memory_space<vmem>>, %arg4: memref<128x128xbf16, #tpu.memory_space<vmem>>, %arg5: memref<1x128xf32, #tpu.memory_space<vmem>>, %arg6: memref<128x128xbf16, #tpu.memory_space<vmem>>, %arg7: memref<1x128xf32, #tpu.memory_space<vmem>>, %arg8: memref<128x128xbf16, #tpu.memory_space<vmem>>, %arg9: memref<1x128xf32, #tpu.memory_space<vmem>>, %arg10: memref<128x128xbf16, #tpu.memory_space<vmem>>, %arg11: memref<1x128xf32, #tpu.memory_space<vmem>>, %arg12: memref<8x128xf32, #tpu.memory_space<vmem>>) attributes {dimension_semantics = [#tpu.dimension_semantics<parallel>], iteration_bounds = array<i64: 1>, scalar_prefetch = 0 : i64, scratch_operands = 0 : i64, tpu.core_type = #tpu.core_type<tc>, window_params = [{transform_indices = @transform_0, window_bounds = array<i64: 8, 128>}, {pipeline_mode = #tpu.pipeline_mode<synchronous>, transform_indices = @transform_1, window_bounds = array<i64: 1, 128>}, {pipeline_mode = #tpu.pipeline_mode<synchronous>, transform_indices = @transform_2, window_bounds = array<i64: 1, 128>}, {pipeline_mode = #tpu.pipeline_mode<synchronous>, transform_indices = @transform_3, window_bounds = array<i64: 128, 128>}, {pipeline_mode = #tpu.pipeline_mode<synchronous>, transform_indices = @transform_4, window_bounds = array<i64: 1, 128>}, {pipeline_mode = #tpu.pipeline_mode<synchronous>, transform_indices = @transform_5, window_bounds = array<i64: 128, 128>}, {pipeline_mode = #tpu.pipeline_mode<synchronous>, transform_indices = @transform_6, window_bounds = array<i64: 1, 128>}, {pipeline_mode = #tpu.pipeline_mode<synchronous>, transform_indices = @transform_7, window_bounds = array<i64: 128, 128>}, {pipeline_mode = #tpu.pipeline_mode<synchronous>, transform_indices = @transform_8, window_bounds = array<i64: 1, 128>}, {pipeline_mode = #tpu.pipeline_mode<synchronous>, transform_indices = @transform_9, window_bounds = array<i64: 128, 128>}, {pipeline_mode = #tpu.pipeline_mode<synchronous>, transform_indices = @transform_10, window_bounds = array<i64: 1, 128>}, {transform_indices = @transform_11, window_bounds = array<i64: 8, 128>}]} {
    %c0 = arith.constant 0 : index
    %c0_0 = arith.constant 0 : index
    %0 = vector.load %arg1[%c0, %c0_0] : memref<8x128xf32, #tpu.memory_space<vmem>>, vector<8x128xf32>
    %c0_1 = arith.constant 0 : index
    %c0_2 = arith.constant 0 : index
    %1 = vector.load %arg2[%c0_1, %c0_2] : memref<1x128xf32, #tpu.memory_space<vmem>>, vector<1x128xf32>
    %2 = vector.broadcast %1 : vector<1x128xf32> to vector<8x128xf32>
    %3 = arith.mulf %0, %2 : vector<8x128xf32>
    %c0_3 = arith.constant 0 : index
    %c0_4 = arith.constant 0 : index
    %4 = vector.load %arg3[%c0_3, %c0_4] : memref<1x128xf32, #tpu.memory_space<vmem>>, vector<1x128xf32>
    %5 = vector.broadcast %4 : vector<1x128xf32> to vector<8x128xf32>
    %6 = arith.addf %3, %5 : vector<8x128xf32>
    %7 = arith.truncf %6 : vector<8x128xf32> to vector<8x128xbf16>
    %c0_5 = arith.constant 0 : index
    %c0_6 = arith.constant 0 : index
    %8 = vector.load %arg4[%c0_5, %c0_6] : memref<128x128xbf16, #tpu.memory_space<vmem>>, vector<128x128xbf16>
    %cst = arith.constant dense<0.000000e+00> : vector<8x128xf32>
    %9 = tpu.matmul %7, %8, %cst {dimension_numbers = #tpu.dot_dimension_numbers<[1], [0], [0], [1], [0, 0, 1, 1], [], []>} : vector<8x128xbf16>, vector<128x128xbf16>, vector<8x128xf32> -> vector<8x128xf32>
    %c0_7 = arith.constant 0 : index
    %c0_8 = arith.constant 0 : index
    %10 = vector.load %arg5[%c0_7, %c0_8] : memref<1x128xf32, #tpu.memory_space<vmem>>, vector<1x128xf32>
    %11 = vector.broadcast %10 : vector<1x128xf32> to vector<8x128xf32>
    %12 = arith.addf %9, %11 : vector<8x128xf32>
    %cst_9 = arith.constant 0.000000e+00 : f32
    %13 = vector.broadcast %cst_9 : f32 to vector<8x128xf32>
    %14 = arith.maximumf %12, %13 : vector<8x128xf32>
    %15 = arith.truncf %14 : vector<8x128xf32> to vector<8x128xbf16>
    %c0_10 = arith.constant 0 : index
    %c0_11 = arith.constant 0 : index
    %16 = vector.load %arg6[%c0_10, %c0_11] : memref<128x128xbf16, #tpu.memory_space<vmem>>, vector<128x128xbf16>
    %cst_12 = arith.constant dense<0.000000e+00> : vector<8x128xf32>
    %17 = tpu.matmul %15, %16, %cst_12 {dimension_numbers = #tpu.dot_dimension_numbers<[1], [0], [0], [1], [0, 0, 1, 1], [], []>} : vector<8x128xbf16>, vector<128x128xbf16>, vector<8x128xf32> -> vector<8x128xf32>
    %c0_13 = arith.constant 0 : index
    %c0_14 = arith.constant 0 : index
    %18 = vector.load %arg7[%c0_13, %c0_14] : memref<1x128xf32, #tpu.memory_space<vmem>>, vector<1x128xf32>
    %19 = vector.broadcast %18 : vector<1x128xf32> to vector<8x128xf32>
    %20 = arith.addf %17, %19 : vector<8x128xf32>
    %21 = arith.truncf %20 : vector<8x128xf32> to vector<8x128xbf16>
    %c0_15 = arith.constant 0 : index
    %c0_16 = arith.constant 0 : index
    %22 = vector.load %arg8[%c0_15, %c0_16] : memref<128x128xbf16, #tpu.memory_space<vmem>>, vector<128x128xbf16>
    %cst_17 = arith.constant dense<0.000000e+00> : vector<8x128xf32>
    %23 = tpu.matmul %21, %22, %cst_17 {dimension_numbers = #tpu.dot_dimension_numbers<[1], [0], [0], [1], [0, 0, 1, 1], [], []>} : vector<8x128xbf16>, vector<128x128xbf16>, vector<8x128xf32> -> vector<8x128xf32>
    %c0_18 = arith.constant 0 : index
    %c0_19 = arith.constant 0 : index
    %24 = vector.load %arg9[%c0_18, %c0_19] : memref<1x128xf32, #tpu.memory_space<vmem>>, vector<1x128xf32>
    %25 = vector.broadcast %24 : vector<1x128xf32> to vector<8x128xf32>
    %26 = arith.addf %23, %25 : vector<8x128xf32>
    %cst_20 = arith.constant 0.000000e+00 : f32
    %27 = vector.broadcast %cst_20 : f32 to vector<8x128xf32>
    %28 = arith.maximumf %26, %27 : vector<8x128xf32>
    %29 = arith.truncf %28 : vector<8x128xf32> to vector<8x128xbf16>
    %c0_21 = arith.constant 0 : index
    %c0_22 = arith.constant 0 : index
    %30 = vector.load %arg10[%c0_21, %c0_22] : memref<128x128xbf16, #tpu.memory_space<vmem>>, vector<128x128xbf16>
    %cst_23 = arith.constant dense<0.000000e+00> : vector<8x128xf32>
    %31 = tpu.matmul %29, %30, %cst_23 {dimension_numbers = #tpu.dot_dimension_numbers<[1], [0], [0], [1], [0, 0, 1, 1], [], []>} : vector<8x128xbf16>, vector<128x128xbf16>, vector<8x128xf32> -> vector<8x128xf32>
    %c0_24 = arith.constant 0 : index
    %c0_25 = arith.constant 0 : index
    %32 = vector.load %arg11[%c0_24, %c0_25] : memref<1x128xf32, #tpu.memory_space<vmem>>, vector<1x128xf32>
    %33 = vector.broadcast %32 : vector<1x128xf32> to vector<8x128xf32>
    %34 = arith.addf %31, %33 : vector<8x128xf32>
    %35 = arith.negf %34 : vector<8x128xf32>
    %36 = math.exp %35 : vector<8x128xf32>
    %cst_26 = arith.constant 1.000000e+00 : f32
    %37 = vector.broadcast %cst_26 : f32 to vector<8x128xf32>
    %38 = arith.addf %37, %36 : vector<8x128xf32>
    %39 = arith.divf %37, %38 : vector<8x128xf32>
    %40 = arith.mulf %20, %39 : vector<8x128xf32>
    %41 = arith.addf %40, %0 : vector<8x128xf32>
    %c0_27 = arith.constant 0 : index
    %c0_28 = arith.constant 0 : index
    %42 = vector.load %arg12[%c0_27, %c0_28] : memref<8x128xf32, #tpu.memory_space<vmem>>, vector<8x128xf32>
    tpu.vector_store %arg12[%c0_27, %c0_28], %41 {strides = array<i32>} : memref<8x128xf32, #tpu.memory_space<vmem>>, vector<8x128xf32>,
    return
  }
  func.func @transform_0(%arg0: i32) -> (i32, i32) {
    %c0_i32 = arith.constant 0 : i32
    %c0_i32_0 = arith.constant 0 : i32
    return %arg0, %c0_i32 : i32, i32
  }
  func.func @transform_1(%arg0: i32) -> (i32, i32) {
    %c0_i32 = arith.constant 0 : i32
    %c0_i32_0 = arith.constant 0 : i32
    %c0_i32_1 = arith.constant 0 : i32
    return %c0_i32, %c0_i32_0 : i32, i32
  }
  func.func @transform_2(%arg0: i32) -> (i32, i32) {
    %c0_i32 = arith.constant 0 : i32
    %c0_i32_0 = arith.constant 0 : i32
    %c0_i32_1 = arith.constant 0 : i32
    return %c0_i32, %c0_i32_0 : i32, i32
  }
  func.func @transform_3(%arg0: i32) -> (i32, i32) {
    %c0_i32 = arith.constant 0 : i32
    %c0_i32_0 = arith.constant 0 : i32
    %c0_i32_1 = arith.constant 0 : i32
    return %c0_i32, %c0_i32_0 : i32, i32
  }
  func.func @transform_4(%arg0: i32) -> (i32, i32) {
    %c0_i32 = arith.constant 0 : i32
    %c0_i32_0 = arith.constant 0 : i32
    %c0_i32_1 = arith.constant 0 : i32
    return %c0_i32, %c0_i32_0 : i32, i32
  }
  func.func @transform_5(%arg0: i32) -> (i32, i32) {
    %c0_i32 = arith.constant 0 : i32
    %c0_i32_0 = arith.constant 0 : i32
    %c0_i32_1 = arith.constant 0 : i32
    return %c0_i32, %c0_i32_0 : i32, i32
  }
  func.func @transform_6(%arg0: i32) -> (i32, i32) {
    %c0_i32 = arith.constant 0 : i32
    %c0_i32_0 = arith.constant 0 : i32
    %c0_i32_1 = arith.constant 0 : i32
    return %c0_i32, %c0_i32_0 : i32, i32
  }
  func.func @transform_7(%arg0: i32) -> (i32, i32) {
    %c0_i32 = arith.constant 0 : i32
    %c0_i32_0 = arith.constant 0 : i32
    %c0_i32_1 = arith.constant 0 : i32
    return %c0_i32, %c0_i32_0 : i32, i32
  }
  func.func @transform_8(%arg0: i32) -> (i32, i32) {
    %c0_i32 = arith.constant 0 : i32
    %c0_i32_0 = arith.constant 0 : i32
    %c0_i32_1 = arith.constant 0 : i32
    return %c0_i32, %c0_i32_0 : i32, i32
  }
  func.func @transform_9(%arg0: i32) -> (i32, i32) {
    %c0_i32 = arith.constant 0 : i32
    %c0_i32_0 = arith.constant 0 : i32
    %c0_i32_1 = arith.constant 0 : i32
    return %c0_i32, %c0_i32_0 : i32, i32
  }
  func.func @transform_10(%arg0: i32) -> (i32, i32) {
    %c0_i32 = arith.constant 0 : i32
    %c0_i32_0 = arith.constant 0 : i32
    %c0_i32_1 = arith.constant 0 : i32
    return %c0_i32, %c0_i32_0 : i32, i32
  }
  func.func @transform_11(%arg0: i32) -> (i32, i32) {
    %c0_i32 = arith.constant 0 : i32
    %c0_i32_0 = arith.constant 0 : i32
    return %arg0, %c0_i32 : i32, i32
  }
}

</mosaic_0001>

<llo_original>
// kernel: tpu_custom_call.1
$region0: #{tpu_custom_call.1}
  #allocation0 [shape = 'u32[]', space=smem, size = 0x4, offset = 0x4, fixed_abs, tag = 'smem constant byte address 0x4 - core index']
  #allocation1 [shape = 'u32[72,128]{1,0:T(1,128)}', space=vmem, size = 0x9000, scoped, tag = 'internal scratch']
  %s0 = inlined_call_operand.hbm [shape: f32[8,128], index: 0, kind: input, shape index: {}]
  %s1 = inlined_call_operand.hbm [shape: f32[1,128], index: 1, kind: input, shape index: {}]
  %s2 = inlined_call_operand.vmem [shape: f32[1,128], index: 2, kind: input, shape index: {}]
  %s3 = inlined_call_operand.hbm [shape: bf16[128,128], index: 3, kind: input, shape index: {}]
  %s4 = inlined_call_operand.vmem [shape: f32[1,128], index: 4, kind: input, shape index: {}]
  %s5 = inlined_call_operand.hbm [shape: bf16[128,128], index: 5, kind: input, shape index: {}]
  %s6 = inlined_call_operand.vmem [shape: f32[1,128], index: 6, kind: input, shape index: {}]
  %s7 = inlined_call_operand.hbm [shape: bf16[128,128], index: 7, kind: input, shape index: {}]
  %s8 = inlined_call_operand.vmem [shape: f32[1,128], index: 8, kind: input, shape index: {}]
  %s9 = inlined_call_operand.hbm [shape: bf16[128,128], index: 9, kind: input, shape index: {}]
  %s10 = inlined_call_operand.vmem [shape: f32[1,128], index: 10, kind: input, shape index: {}]
  %s11 = inlined_call_operand.hbm [shape: f32[8,128], index: 11, kind: output, shape index: {}]
  %s12 = sld [smem:[#allocation0]]
  $region78: #{tpu_custom_call.1} parent=0
    _
  %s14 = ssub.s32 1, %s12
  %s15 = scalar_select 0, %s14, %s12
  $region1: #{tpu_custom_call.1} parent=0
    #allocation2 [shape = 'u8[4096]{0}', space=vmem, size = 0x1000, scoped, tag = 'input window, operand 0, single buffered']
    #allocation3 [shape = 's32[1]{0}', space=sflag, size = 0x4, scoped, tag = 'scoped memory for tpu_custom_call.1']
    #allocation4 [shape = 's32[1]{0}', space=sflag, size = 0x4, scoped, tag = 'scoped memory for tpu_custom_call.1']
    #allocation5 [shape = 'u8[512]{0}', space=vmem, size = 0x400, scoped, tag = 'input window, operand 1, single buffered']
    #allocation6 [shape = 's32[1]{0}', space=sflag, size = 0x4, scoped, tag = 'scoped memory for tpu_custom_call.1']
    #allocation7 [shape = 'u8[32768]{0}', space=vmem, size = 0x8000, scoped, tag = 'input window, operand 3, single buffered']
    #allocation8 [shape = 'u8[32768]{0}', space=vmem, size = 0x8000, scoped, tag = 'input window, operand 5, single buffered']
    #allocation9 [shape = 's32[1]{0}', space=sflag, size = 0x4, scoped, tag = 'scoped memory for tpu_custom_call.1']
    #allocation10 [shape = 'u8[32768]{0}', space=vmem, size = 0x8000, scoped, tag = 'input window, operand 7, single buffered']
    #allocation11 [shape = 'u8[32768]{0}', space=vmem, size = 0x8000, scoped, tag = 'input window, operand 9, single buffered']
    #allocation12 [shape = 's32[1]{0}', space=sflag, size = 0x4, scoped, tag = 'scoped memory for tpu_custom_call.1']
    #allocation13 [shape = 'u8[4096]{0}', space=vmem, size = 0x1000, scoped, tag = 'output window, operand 0, single buffered']
    %16 = vsyncpa [#allocation3], 0
    %17 = vsyncpa [#allocation6], 0
    %18 = vsyncpa [#allocation9], 0
    %19 = vsyncpa [#allocation12], 0
    %20 = vsyncpa [#allocation4], 0
    // Predicated region
    $region2: #{tpu_custom_call.1} parent=1 // pred_check
      _
    $region3: #{tpu_custom_call.1} parent=1 // pred_check_branch
      %22 = sbr.rel (0) target = $region5
    $region4: #{tpu_custom_call.1} parent=1 // pred_region
      %24 = vsyncadd [#allocation3], 0
      %s26 = sshll.u32 %s0, 4
      %s27 = int_to_ptr.hbm [resolvable:$true] %s26
      %s28 = sshll.u32 [#allocation2], 4
      %s29 = int_to_ptr.vmem [resolvable:$true] %s28
      %31 = dma.hbm_to_vmem [thread:$0]  %s27, 128, %s29, [#allocation3]
    $region5: #{tpu_custom_call.1} parent=1 // pred_fallthru
      _
    // Predicated region
    $region6: #{tpu_custom_call.1} parent=1 // pred_check
      _
    $region7: #{tpu_custom_call.1} parent=1 // pred_check_branch
      %33 = sbr.rel (0) target = $region9
    $region8: #{tpu_custom_call.1} parent=1 // pred_region
      %35 = vsyncadd [#allocation6], 0
      %s37 = sshll.u32 %s1, 4
      %s38 = int_to_ptr.hbm [resolvable:$true] %s37
      %s39 = sshll.u32 [#allocation5], 4
      %s40 = int_to_ptr.vmem [resolvable:$true] %s39
      %42 = dma.hbm_to_vmem [thread:$0]  %s38, 16, %s40, [#allocation6]
    $region9: #{tpu_custom_call.1} parent=1 // pred_fallthru
      _
    // Predicated region
    $region10: #{tpu_custom_call.1} parent=1 // pred_check
      _
    $region11: #{tpu_custom_call.1} parent=1 // pred_check_branch
      %44 = sbr.rel (0) target = $region13
    $region12: #{tpu_custom_call.1} parent=1 // pred_region
      _
    $region13: #{tpu_custom_call.1} parent=1 // pred_fallthru
      _
    // Predicated region
    $region14: #{tpu_custom_call.1} parent=1 // pred_check
      _
    $region15: #{tpu_custom_call.1} parent=1 // pred_check_branch
      %46 = sbr.rel (0) target = $region17
    $region16: #{tpu_custom_call.1} parent=1 // pred_region
      %48 = vsyncadd [#allocation6], 0
      %s49 = sshll.u32 %s3, 4
      %s50 = int_to_ptr.hbm [resolvable:$true] %s49
      %s51 = sshll.u32 [#allocation7], 4
      %s52 = int_to_ptr.vmem [resolvable:$true] %s51
      %57 = dma.hbm_to_vmem [thread:$0]  %s50, 1024, %s52, [#allocation6], 64, 64, 4
    $region17: #{tpu_custom_call.1} parent=1 // pred_fallthru
      _
    // Predicated region
    $region18: #{tpu_custom_call.1} parent=1 // pred_check
      _
    $region19: #{tpu_custom_call.1} parent=1 // pred_check_branch
      %59 = sbr.rel (0) target = $region21
    $region20: #{tpu_custom_call.1} parent=1 // pred_region
      _
    $region21: #{tpu_custom_call.1} parent=1 // pred_fallthru
      _
    // Predicated region
    $region22: #{tpu_custom_call.1} parent=1 // pred_check
      _
    $region23: #{tpu_custom_call.1} parent=1 // pred_check_branch
      %61 = sbr.rel (0) target = $region25
    $region24: #{tpu_custom_call.1} parent=1 // pred_region
      %63 = vsyncadd [#allocation9], 0
      %s64 = sshll.u32 %s5, 4
      %s65 = int_to_ptr.hbm [resolvable:$true] %s64
      %s66 = sshll.u32 [#allocation8], 4
      %s67 = int_to_ptr.vmem [resolvable:$true] %s66
      %72 = dma.hbm_to_vmem [thread:$0]  %s65, 1024, %s67, [#allocation9], 64, 64, 4
    $region25: #{tpu_custom_call.1} parent=1 // pred_fallthru
      _
    // Predicated region
    $region26: #{tpu_custom_call.1} parent=1 // pred_check
      _
    $region27: #{tpu_custom_call.1} parent=1 // pred_check_branch
      %74 = sbr.rel (0) target = $region29
    $region28: #{tpu_custom_call.1} parent=1 // pred_region
      _
    $region29: #{tpu_custom_call.1} parent=1 // pred_fallthru
      _
    // Predicated region
    $region30: #{tpu_custom_call.1} parent=1 // pred_check
      _
    $region31: #{tpu_custom_call.1} parent=1 // pred_check_branch
      %76 = sbr.rel (0) target = $region33
    $region32: #{tpu_custom_call.1} parent=1 // pred_region
      %78 = vsyncadd [#allocation9], 0
      %s79 = sshll.u32 %s7, 4
      %s80 = int_to_ptr.hbm [resolvable:$true] %s79
      %s81 = sshll.u32 [#allocation10], 4
      %s82 = int_to_ptr.vmem [resolvable:$true] %s81
      %87 = dma.hbm_to_vmem [thread:$0]  %s80, 1024, %s82, [#allocation9], 64, 64, 4
    $region33: #{tpu_custom_call.1} parent=1 // pred_fallthru
      _
    // Predicated region
    $region34: #{tpu_custom_call.1} parent=1 // pred_check
      _
    $region35: #{tpu_custom_call.1} parent=1 // pred_check_branch
      %89 = sbr.rel (0) target = $region37
    $region36: #{tpu_custom_call.1} parent=1 // pred_region
      _
    $region37: #{tpu_custom_call.1} parent=1 // pred_fallthru
      _
    // Predicated region
    $region38: #{tpu_custom_call.1} parent=1 // pred_check
      _
    $region39: #{tpu_custom_call.1} parent=1 // pred_check_branch
      %91 = sbr.rel (0) target = $region41
    $region40: #{tpu_custom_call.1} parent=1 // pred_region
      %93 = vsyncadd [#allocation12], 0
      %s94 = sshll.u32 %s9, 4
      %s95 = int_to_ptr.hbm [resolvable:$true] %s94
      %s96 = sshll.u32 [#allocation11], 4
      %s97 = int_to_ptr.vmem [resolvable:$true] %s96
      %102 = dma.hbm_to_vmem [thread:$0]  %s95, 1024, %s97, [#allocation12], 64, 64, 4
    $region41: #{tpu_custom_call.1} parent=1 // pred_fallthru
      _
    // Predicated region
    $region42: #{tpu_custom_call.1} parent=1 // pred_check
      _
    $region43: #{tpu_custom_call.1} parent=1 // pred_check_branch
      %104 = sbr.rel (0) target = $region45
    $region44: #{tpu_custom_call.1} parent=1 // pred_region
      _
    $region45: #{tpu_custom_call.1} parent=1 // pred_fallthru
      _
    // Predicated region
    $region46: #{tpu_custom_call.1} parent=1 // pred_check
      _
    $region47: #{tpu_custom_call.1} parent=1 // pred_check_branch
      %106 = sbr.rel (0) target = $region49
    $region48: #{tpu_custom_call.1} parent=1 // pred_region
      %108 = dma.done [#allocation3], 128
    $region49: #{tpu_custom_call.1} parent=1 // pred_fallthru
      _
    // Predicated region
    $region50: #{tpu_custom_call.1} parent=1 // pred_check
      _
    $region51: #{tpu_custom_call.1} parent=1 // pred_check_branch
      %110 = sbr.rel (0) target = $region53
    $region52: #{tpu_custom_call.1} parent=1 // pred_region
      %112 = dma.done [#allocation6], 16
    $region53: #{tpu_custom_call.1} parent=1 // pred_fallthru
      _
    // Predicated region
    $region54: #{tpu_custom_call.1} parent=1 // pred_check
      _
    $region55: #{tpu_custom_call.1} parent=1 // pred_check_branch
      %114 = sbr.rel (0) target = $region57
    $region56: #{tpu_custom_call.1} parent=1 // pred_region
      %116 = dma.done [#allocation6], 1024
    $region57: #{tpu_custom_call.1} parent=1 // pred_fallthru
      _
    // Predicated region
    $region58: #{tpu_custom_call.1} parent=1 // pred_check
      _
    $region59: #{tpu_custom_call.1} parent=1 // pred_check_branch
      %118 = sbr.rel (0) target = $region61
    $region60: #{tpu_custom_call.1} parent=1 // pred_region
      %120 = dma.done [#allocation9], 1024
    $region61: #{tpu_custom_call.1} parent=1 // pred_fallthru
      _
    // Predicated region
    $region62: #{tpu_custom_call.1} parent=1 // pred_check
      _
    $region63: #{tpu_custom_call.1} parent=1 // pred_check_branch
      %122 = sbr.rel (0) target = $region65
    $region64: #{tpu_custom_call.1} parent=1 // pred_region
      %124 = dma.done [#allocation9], 1024
    $region65: #{tpu_custom_call.1} parent=1 // pred_fallthru
      _
    // Predicated region
    $region66: #{tpu_custom_call.1} parent=1 // pred_check
      _
    $region67: #{tpu_custom_call.1} parent=1 // pred_check_branch
      %126 = sbr.rel (0) target = $region69
    $region68: #{tpu_custom_call.1} parent=1 // pred_region
      %128 = dma.done [#allocation12], 1024
    $region69: #{tpu_custom_call.1} parent=1 // pred_fallthru
      _
    %v129 = vld [vmem:[#allocation2] sm:$0xff]
    %v130 = vld [vmem:[#allocation5] sm:$0x1]
    %v132 = vperm.slane %v130, 0
    %v134 = vmul.f32 %v129, %v132
    %v135 = vld [vmem:[%s2] sm:$0x1]
    %v137 = vperm.slane %v135, 0
    %v139 = vadd.f32 %v134, %v137
    %v140 = vpack.c.bf16 %v139, %v139
    %v141 = vld [vmem:[#allocation7] sm:$0xf]
    %v142 = vld [vmem:[#allocation7 + $0x4] sm:$0xf]
    %v143 = vld [vmem:[#allocation7 + $0x8] sm:$0xf]
    %v144 = vld [vmem:[#allocation7 + $0xc] sm:$0xf]
    %v145 = vld [vmem:[#allocation7 + $0x10] sm:$0xf]
    %v146 = vld [vmem:[#allocation7 + $0x14] sm:$0xf]
    %v147 = vld [vmem:[#allocation7 + $0x18] sm:$0xf]
    %v148 = vld [vmem:[#allocation7 + $0x1c] sm:$0xf]
    %v149 = vld [vmem:[#allocation7 + $0x20] sm:$0xf]
    %v150 = vld [vmem:[#allocation7 + $0x24] sm:$0xf]
    %v151 = vld [vmem:[#allocation7 + $0x28] sm:$0xf]
    %v152 = vld [vmem:[#allocation7 + $0x2c] sm:$0xf]
    %v153 = vld [vmem:[#allocation7 + $0x30] sm:$0xf]
    %v154 = vld [vmem:[#allocation7 + $0x34] sm:$0xf]
    %v155 = vld [vmem:[#allocation7 + $0x38] sm:$0xf]
    %v156 = vld [vmem:[#allocation7 + $0x3c] sm:$0xf]
    %v157 = vld [vmem:[%s4] sm:$0x1]
    %v159 = vperm.slane %v157, 0
    %v177 = vunpack.c.l.b16 %v141
    %v178 = vunpack.c.l.b16 %v142
    %v179 = vunpack.c.l.b16 %v143
    %v180 = vunpack.c.l.b16 %v144
    %v181 = vunpack.c.l.b16 %v145
    %v182 = vunpack.c.l.b16 %v146
    %v183 = vunpack.c.l.b16 %v147
    %v184 = vunpack.c.l.b16 %v148
    %v185 = vunpack.c.l.b16 %v149
    %v186 = vunpack.c.l.b16 %v150
    %v187 = vunpack.c.l.b16 %v151
    %v188 = vunpack.c.l.b16 %v152
    %v189 = vunpack.c.l.b16 %v153
    %v190 = vunpack.c.l.b16 %v154
    %v191 = vunpack.c.l.b16 %v155
    %v192 = vunpack.c.l.b16 %v156
    %v193 = vpack.c.b16 %v178, %v177
    %v194 = vpack.c.b16 %v180, %v179
    %v195 = vpack.c.b16 %v182, %v181
    %v196 = vpack.c.b16 %v184, %v183
    %v197 = vpack.c.b16 %v186, %v185
    %v198 = vpack.c.b16 %v188, %v187
    %v199 = vpack.c.b16 %v190, %v189
    %v200 = vpack.c.b16 %v192, %v191
    %209 = vmatpush.bf16.msra.mxu0 %v200
    %210 = vmatpush.bf16.msra.mxu0 %v199
    %211 = vmatpush.bf16.msra.mxu0 %v198
    %212 = vmatpush.bf16.msra.mxu0 %v197
    %213 = vmatpush.bf16.msra.mxu0 %v196
    %214 = vmatpush.bf16.msra.mxu0 %v195
    %215 = vmatpush.bf16.msra.mxu0 %v194
    %216 = vmatpush.bf16.msra.mxu0 %v193
    %217 = vmatmul.bf16.gmra.mxu0 %v140
    %v218 = vpop.f32.mrf.mxu0
    %v219 = vadd.f32 %v159, %v218
    %v220 = vpop.f32.mrf.mxu0
    %221 = vdwg.mxu0
    %v222 = vmax.f32 %v219, 0.0
    %v223 = vpack.c.bf16 %v222, %v222
    %v224 = vld [vmem:[#allocation8] sm:$0xf]
    %v225 = vld [vmem:[#allocation8 + $0x4] sm:$0xf]
    %v226 = vld [vmem:[#allocation8 + $0x8] sm:$0xf]
    %v227 = vld [vmem:[#allocation8 + $0xc] sm:$0xf]
    %v228 = vld [vmem:[#allocation8 + $0x10] sm:$0xf]
    %v229 = vld [vmem:[#allocation8 + $0x14] sm:$0xf]
    %v230 = vld [vmem:[#allocation8 + $0x18] sm:$0xf]
    %v231 = vld [vmem:[#allocation8 + $0x1c] sm:$0xf]
    %v232 = vld [vmem:[#allocation8 + $0x20] sm:$0xf]
    %v233 = vld [vmem:[#allocation8 + $0x24] sm:$0xf]
    %v234 = vld [vmem:[#allocation8 + $0x28] sm:$0xf]
    %v235 = vld [vmem:[#allocation8 + $0x2c] sm:$0xf]
    %v236 = vld [vmem:[#allocation8 + $0x30] sm:$0xf]
    %v237 = vld [vmem:[#allocation8 + $0x34] sm:$0xf]
    %v238 = vld [vmem:[#allocation8 + $0x38] sm:$0xf]
    %v239 = vld [vmem:[#allocation8 + $0x3c] sm:$0xf]
    %v240 = vld [vmem:[%s6] sm:$0x1]
    %v242 = vperm.slane %v240, 0
    %v260 = vunpack.c.l.b16 %v224
    %v261 = vunpack.c.l.b16 %v225
    %v262 = vunpack.c.l.b16 %v226
    %v263 = vunpack.c.l.b16 %v227
    %v264 = vunpack.c.l.b16 %v228
    %v265 = vunpack.c.l.b16 %v229
    %v266 = vunpack.c.l.b16 %v230
    %v267 = vunpack.c.l.b16 %v231
    %v268 = vunpack.c.l.b16 %v232
    %v269 = vunpack.c.l.b16 %v233
    %v270 = vunpack.c.l.b16 %v234
    %v271 = vunpack.c.l.b16 %v235
    %v272 = vunpack.c.l.b16 %v236
    %v273 = vunpack.c.l.b16 %v237
    %v274 = vunpack.c.l.b16 %v238
    %v275 = vunpack.c.l.b16 %v239
    %v276 = vpack.c.b16 %v261, %v260
    %v277 = vpack.c.b16 %v263, %v262
    %v278 = vpack.c.b16 %v265, %v264
    %v279 = vpack.c.b16 %v267, %v266
    %v280 = vpack.c.b16 %v269, %v268
    %v281 = vpack.c.b16 %v271, %v270
    %v282 = vpack.c.b16 %v273, %v272
    %v283 = vpack.c.b16 %v275, %v274
    %292 = vmatpush.bf16.msra.mxu0 %v283
    %293 = vmatpush.bf16.msra.mxu0 %v282
    %294 = vmatpush.bf16.msra.mxu0 %v281
    %295 = vmatpush.bf16.msra.mxu0 %v280
    %296 = vmatpush.bf16.msra.mxu0 %v279
    %297 = vmatpush.bf16.msra.mxu0 %v278
    %298 = vmatpush.bf16.msra.mxu0 %v277
    %299 = vmatpush.bf16.msra.mxu0 %v276
    %300 = vmatmul.bf16.gmra.mxu0 %v223
    %v301 = vpop.f32.mrf.mxu0
    %v302 = vadd.f32 %v242, %v301
    %v303 = vpop.f32.mrf.mxu0
    %304 = vdwg.mxu0
    %v305 = vpack.c.bf16 %v302, %v302
    %v306 = vld [vmem:[#allocation10] sm:$0xf]
    %v307 = vld [vmem:[#allocation10 + $0x4] sm:$0xf]
    %v308 = vld [vmem:[#allocation10 + $0x8] sm:$0xf]
    %v309 = vld [vmem:[#allocation10 + $0xc] sm:$0xf]
    %v310 = vld [vmem:[#allocation10 + $0x10] sm:$0xf]
    %v311 = vld [vmem:[#allocation10 + $0x14] sm:$0xf]
    %v312 = vld [vmem:[#allocation10 + $0x18] sm:$0xf]
    %v313 = vld [vmem:[#allocation10 + $0x1c] sm:$0xf]
    %v314 = vld [vmem:[#allocation10 + $0x20] sm:$0xf]
    %v315 = vld [vmem:[#allocation10 + $0x24] sm:$0xf]
    %v316 = vld [vmem:[#allocation10 + $0x28] sm:$0xf]
    %v317 = vld [vmem:[#allocation10 + $0x2c] sm:$0xf]
    %v318 = vld [vmem:[#allocation10 + $0x30] sm:$0xf]
    %v319 = vld [vmem:[#allocation10 + $0x34] sm:$0xf]
    %v320 = vld [vmem:[#allocation10 + $0x38] sm:$0xf]
    %v321 = vld [vmem:[#allocation10 + $0x3c] sm:$0xf]
    %v322 = vld [vmem:[%s8] sm:$0x1]
    %v324 = vperm.slane %v322, 0
    %v342 = vunpack.c.l.b16 %v306
    %v343 = vunpack.c.l.b16 %v307
    %v344 = vunpack.c.l.b16 %v308
    %v345 = vunpack.c.l.b16 %v309
    %v346 = vunpack.c.l.b16 %v310
    %v347 = vunpack.c.l.b16 %v311
    %v348 = vunpack.c.l.b16 %v312
    %v349 = vunpack.c.l.b16 %v313
    %v350 = vunpack.c.l.b16 %v314
    %v351 = vunpack.c.l.b16 %v315
    %v352 = vunpack.c.l.b16 %v316
    %v353 = vunpack.c.l.b16 %v317
    %v354 = vunpack.c.l.b16 %v318
    %v355 = vunpack.c.l.b16 %v319
    %v356 = vunpack.c.l.b16 %v320
    %v357 = vunpack.c.l.b16 %v321
    %v358 = vpack.c.b16 %v343, %v342
    %v359 = vpack.c.b16 %v345, %v344
    %v360 = vpack.c.b16 %v347, %v346
    %v361 = vpack.c.b16 %v349, %v348
    %v362 = vpack.c.b16 %v351, %v350
    %v363 = vpack.c.b16 %v353, %v352
    %v364 = vpack.c.b16 %v355, %v354
    %v365 = vpack.c.b16 %v357, %v356
    %374 = vmatpush.bf16.msra.mxu0 %v365
    %375 = vmatpush.bf16.msra.mxu0 %v364
    %376 = vmatpush.bf16.msra.mxu0 %v363
    %377 = vmatpush.bf16.msra.mxu0 %v362
    %378 = vmatpush.bf16.msra.mxu0 %v361
    %379 = vmatpush.bf16.msra.mxu0 %v360
    %380 = vmatpush.bf16.msra.mxu0 %v359
    %381 = vmatpush.bf16.msra.mxu0 %v358
    %382 = vmatmul.bf16.gmra.mxu0 %v305
    %v383 = vpop.f32.mrf.mxu0
    %v384 = vadd.f32 %v324, %v383
    %v385 = vpop.f32.mrf.mxu0
    %386 = vdwg.mxu0
    %v387 = vmax.f32 %v384, 0.0
    %v388 = vpack.c.bf16 %v387, %v387
    %v389 = vld [vmem:[#allocation11] sm:$0xf]
    %v390 = vld [vmem:[#allocation11 + $0x4] sm:$0xf]
    %v391 = vld [vmem:[#allocation11 + $0x8] sm:$0xf]
    %v392 = vld [vmem:[#allocation11 + $0xc] sm:$0xf]
    %v393 = vld [vmem:[#allocation11 + $0x10] sm:$0xf]
    %v394 = vld [vmem:[#allocation11 + $0x14] sm:$0xf]
    %v395 = vld [vmem:[#allocation11 + $0x18] sm:$0xf]
    %v396 = vld [vmem:[#allocation11 + $0x1c] sm:$0xf]
    %v397 = vld [vmem:[#allocation11 + $0x20] sm:$0xf]
    %v398 = vld [vmem:[#allocation11 + $0x24] sm:$0xf]
    %v399 = vld [vmem:[#allocation11 + $0x28] sm:$0xf]
    %v400 = vld [vmem:[#allocation11 + $0x2c] sm:$0xf]
    %v401 = vld [vmem:[#allocation11 + $0x30] sm:$0xf]
    %v402 = vld [vmem:[#allocation11 + $0x34] sm:$0xf]
    %v403 = vld [vmem:[#allocation11 + $0x38] sm:$0xf]
    %v404 = vld [vmem:[#allocation11 + $0x3c] sm:$0xf]
    %v405 = vld [vmem:[%s10] sm:$0x1]
    %v407 = vperm.slane %v405, 0
    %v425 = vunpack.c.l.b16 %v389
    %v426 = vunpack.c.l.b16 %v390
    %v427 = vunpack.c.l.b16 %v391
    %v428 = vunpack.c.l.b16 %v392
    %v429 = vunpack.c.l.b16 %v393
    %v430 = vunpack.c.l.b16 %v394
    %v431 = vunpack.c.l.b16 %v395
    %v432 = vunpack.c.l.b16 %v396
    %v433 = vunpack.c.l.b16 %v397
    %v434 = vunpack.c.l.b16 %v398
    %v435 = vunpack.c.l.b16 %v399
    %v436 = vunpack.c.l.b16 %v400
    %v437 = vunpack.c.l.b16 %v401
    %v438 = vunpack.c.l.b16 %v402
    %v439 = vunpack.c.l.b16 %v403
    %v440 = vunpack.c.l.b16 %v404
    %v441 = vpack.c.b16 %v426, %v425
    %v442 = vpack.c.b16 %v428, %v427
    %v443 = vpack.c.b16 %v430, %v429
    %v444 = vpack.c.b16 %v432, %v431
    %v445 = vpack.c.b16 %v434, %v433
    %v446 = vpack.c.b16 %v436, %v435
    %v447 = vpack.c.b16 %v438, %v437
    %v448 = vpack.c.b16 %v440, %v439
    %457 = vmatpush.bf16.msra.mxu0 %v448
    %458 = vmatpush.bf16.msra.mxu0 %v447
    %459 = vmatpush.bf16.msra.mxu0 %v446
    %460 = vmatpush.bf16.msra.mxu0 %v445
    %461 = vmatpush.bf16.msra.mxu0 %v444
    %462 = vmatpush.bf16.msra.mxu0 %v443
    %463 = vmatpush.bf16.msra.mxu0 %v442
    %464 = vmatpush.bf16.msra.mxu0 %v441
    %465 = vmatmul.bf16.gmra.mxu0 %v388
    %v466 = vpop.f32.mrf.mxu0
    %v467 = vadd.f32 %v407, %v466
    %v468 = vpop.f32.mrf.mxu0
    %469 = vdwg.mxu0
    %v470 = vxor.u32 %v467, 2147483648
    %v471 = vmul.f32 %v470, 1.442695
    %v472 = vpow.pop %v471
    %v473 = vadd.f32 %v472, 1.0
    %v474 = vrcp.pop %v473
    %v475 = vmul.f32 %v473, %v474
    %v476 = vsub.f32 1.0, %v475
    %v477 = vmul.f32 %v474, %v476
    %v478 = vadd.f32 %v474, %v477
    %vm479 = vweird.f32 %v473
    %vm480 = vweird.f32 %v474
    %vm481 = vmor %vm479, %vm480
    %v482 = vsel %vm481, %v474, %v478
    %v483 = vand.u32 2147483647, %v473
    %vm484 = vcmp.eq.f32.partialorder %v483, 8.507059e+37
    %v485 = vand.u32 %v473, 2147483648
    %v486 = vor.u32 1.1754944e-38, %v485
    %v487 = vsel %vm484, %v486, %v482
    %v488 = vmul.f32 1.0, %v487
    %v489 = vmul.f32 %v302, %v488
    %v490 = vadd.f32 %v489, %v129
    %491 = vst [vmem:[#allocation13] sm:$0xff] %v490
    // Predicated region
    $region70: #{tpu_custom_call.1} parent=1 // pred_check
      _
    $region71: #{tpu_custom_call.1} parent=1 // pred_check_branch
      %493 = sbr.rel (0) target = $region73
    $region72: #{tpu_custom_call.1} parent=1 // pred_region
      %495 = vsyncadd [#allocation4], 0
      %s497 = sshll.u32 [#allocation13], 4
      %s498 = int_to_ptr.vmem [resolvable:$true] %s497
      %s499 = sshll.u32 %s11, 4
      %s500 = int_to_ptr.hbm [resolvable:$true] %s499
      %502 = dma.vmem_to_hbm [thread:$0]  %s498, 128, %s500, [#allocation4]
    $region73: #{tpu_custom_call.1} parent=1 // pred_fallthru
      _
    // Predicated region
    $region74: #{tpu_custom_call.1} parent=1 // pred_check
      _
    $region75: #{tpu_custom_call.1} parent=1 // pred_check_branch
      %504 = sbr.rel (0) target = $region77
    $region76: #{tpu_custom_call.1} parent=1 // pred_region
      %506 = dma.done [#allocation4], 128
    $region77: #{tpu_custom_call.1} parent=1 // pred_fallthru
      _
    %507 = vsyncpa [#allocation3], 1
    %508 = vsyncpa [#allocation6], 1
    %509 = vsyncpa [#allocation9], 1
    %510 = vsyncpa [#allocation12], 1
    %511 = vsyncpa [#allocation4], 1

</llo_original>
